<compile_context>
chip_gen: v7x
topology: tpu7x:2x2x1
jax: 0.10.0
libtpu: 0.0.40
codegen_flags: <defaults>
</compile_context>

<pallas_src>
import functools

import jax
import jax.numpy as jnp
import numpy as np
from jax.experimental import pallas as pl
from jax.experimental.pallas import tpu as pltpu

# Tile caps: MXU/lane aligned; worst-case double-buffered footprint ~18 MiB,
# safe on every generation (v5e/v6e 128 MiB, v7x 64 MiB per TensorCore).
_TM_MAX = 1024   # batch tile
_TN_MAX = 512    # output-feature tile (lane-aligned)
_TK_MAX = 1024   # reduction (input-feature) tile
_LANE = 128


def _round_up(x, m):
    return ((x + m - 1) // m) * m


def _itemsize(dt):
    return np.dtype(dt).itemsize


def _pick_tile(padded_size, max_tile):
    """Pick a tile that exactly divides `padded_size` whenever possible.

    `padded_size` is already alignment-rounded by the caller.  If it fits a
    single tile, use it whole (no extra padding, single grid step); otherwise
    try power-of-two candidates down to 128; only the batch axis can ever hit
    the final fallback (which forces extra padding in the wrapper).
    """
    if padded_size <= max_tile:
        return padded_size
    t = max_tile
    while t > _LANE:
        if padded_size % t == 0:
            return t
        t //= 2
    return t if padded_size % t == 0 else max_tile


# ---------------------------------------------------------------------------
# Kernels
# ---------------------------------------------------------------------------

def _linear_kernel_single_k(x_ref, wt_ref, b_ref, o_ref):
    """K fits a single tile: 2-D grid, no scratch, fused bias + cast."""
    acc = jnp.dot(x_ref[...].astype(wt_ref.dtype), wt_ref[...],
                  preferred_element_type=jnp.float32)
    o_ref[...] = (acc + b_ref[...]).astype(o_ref.dtype)


def _linear_kernel_multi_k_f32out(x_ref, wt_ref, b_ref, o_ref):
    """Multi-K, f32 output: accumulate directly into the resident out block."""
    k = pl.program_id(2)

    @pl.when(k == 0)
    def _init():
        o_ref[...] = jnp.broadcast_to(b_ref[...], o_ref.shape).astype(o_ref.dtype)

    o_ref[...] += jnp.dot(x_ref[...].astype(wt_ref.dtype), wt_ref[...],
                          preferred_element_type=jnp.float32)


def _linear_kernel_multi_k_acc(x_ref, wt_ref, b_ref, o_ref, acc_ref):
    """Multi-K, non-f32 output: f32 VMEM accumulator, cast-only finalize."""
    k = pl.program_id(2)

    @pl.when(k == 0)
    def _init():
        acc_ref[...] = jnp.broadcast_to(b_ref[...], acc_ref.shape).astype(jnp.float32)

    acc_ref[...] += jnp.dot(x_ref[...].astype(wt_ref.dtype), wt_ref[...],
                            preferred_element_type=jnp.float32)

    @pl.when(k == pl.num_programs(2) - 1)
    def _finalize():
        o_ref[...] = acc_ref[...].astype(o_ref.dtype)


# ---------------------------------------------------------------------------
# Parameter prep + forward wrapper
# ---------------------------------------------------------------------------

def prepare_linear_params(weight, bias, *, compute_dtype=jnp.bfloat16):
    """One-time parameter prep (outside the per-step forward path).

    weight: [Out, In] (PyTorch convention), bias: [Out].
    Returns (wt_pad [In_pad, Out_pad] in `compute_dtype`, bias_pad [1, Out_pad]
    in f32) — transposed and zero-padded only to 128-lane multiples so the
    forward wrapper can always pick exactly-dividing tiles.
    """
    out_f, in_f = weight.shape
    out_pad = _round_up(out_f, _LANE)
    in_pad = _round_up(in_f, _LANE)
    wt = jnp.zeros((in_pad, out_pad), compute_dtype)
    wt = wt.at[:in_f, :out_f].set(weight.T.astype(compute_dtype))
    b2d = jnp.zeros((1, out_pad), jnp.float32)
    b2d = b2d.at[0, :out_f].set(bias.astype(jnp.float32))
    return wt, b2d


@functools.partial(jax.jit, static_argnames=("out_features",))
def linear_forward(x, wt_pad, bias_pad, *, out_features):
    """x: [B, In] -> [B, out_features] using pre-padded/transposed params."""
    b_sz, in_f = x.shape
    in_pad, out_pad = wt_pad.shape
    out_dtype = x.dtype

    # Dtype-aware sublane alignment for the batch tile (8 f32 / 16 bf16 / 32 i8).
    sub = max(8, 32 // _itemsize(out_dtype))
    b_pad = _round_up(b_sz, sub)

    tm = _pick_tile(b_pad, _TM_MAX)
    b_pad = _round_up(b_pad, tm)          # only grows in the rare fallback case
    tn = _pick_tile(out_pad, _TN_MAX)     # always divides out_pad (128-multiple)
    tk = _pick_tile(in_pad, _TK_MAX)      # always divides in_pad (128-multiple)
    n_k = in_pad // tk

    # Fast path: skip the zero-pad copy of x when shapes are already aligned.
    if (b_pad != b_sz) or (in_pad != in_f):
        x_p = jnp.zeros((b_pad, in_pad), x.dtype).at[:b_sz, :in_f].set(x)
    else:
        x_p = x

    use_acc_scratch = (n_k > 1) and (np.dtype(out_dtype) != np.dtype(jnp.float32))

    # Double-buffered VMEM footprint estimate -> vmem_limit, capped per chip.
    footprint = 2 * (tm * tk * _itemsize(x.dtype)
                     + tk * tn * _itemsize(wt_pad.dtype)
                     + 8 * tn * _itemsize(bias_pad.dtype)
                     + tm * tn * _itemsize(out_dtype))
    if use_acc_scratch:
        footprint += tm * tn * 4
    try:
        vmem_cap = int(pltpu.get_tpu_info().vmem_capacity_bytes)
    except Exception:
        vmem_cap = 64 * 1024 * 1024  # conservative: v7x per-TC physical VMEM
    vmem_limit = int(min(vmem_cap * 3 // 4,
                         max(32 * 1024 * 1024, 2 * footprint)))

    if n_k == 1:
        # Single K tile: collapse to a 2-D grid, no k axis, no scratch.
        kernel = _linear_kernel_single_k
        grid = (b_pad // tm, out_pad // tn)
        in_specs = [
            pl.BlockSpec((tm, tk), lambda i, j: (i, 0)),   # x tile
            pl.BlockSpec((tk, tn), lambda i, j: (0, j)),   # W.T tile
            pl.BlockSpec((1, tn), lambda i, j: (0, j)),    # bias tile
        ]
        out_specs = pl.BlockSpec((tm, tn), lambda i, j: (i, j))
        scratch = []
        dims = ("parallel", "parallel")
    else:
        grid = (b_pad // tm, out_pad // tn, n_k)
        in_specs = [
            pl.BlockSpec((tm, tk), lambda i, j, k: (i, k)),   # x tile
            pl.BlockSpec((tk, tn), lambda i, j, k: (k, j)),   # W.T tile
            pl.BlockSpec((1, tn), lambda i, j, k: (0, j)),    # bias tile
        ]
        out_specs = pl.BlockSpec((tm, tn), lambda i, j, k: (i, j))
        dims = ("parallel", "parallel", "arbitrary")
        if use_acc_scratch:
            kernel = _linear_kernel_multi_k_acc
            scratch = [pltpu.VMEM((tm, tn), jnp.float32)]
        else:
            kernel = _linear_kernel_multi_k_f32out
            scratch = []

    out_padded = pl.pallas_call(
        kernel,
        out_shape=jax.ShapeDtypeStruct((b_pad, out_pad), out_dtype),
        grid_spec=pltpu.PrefetchScalarGridSpec(
            num_scalar_prefetch=0,
            grid=grid,
            in_specs=in_specs,
            out_specs=out_specs,
            scratch_shapes=scratch,
        ),
        compiler_params=pltpu.CompilerParams(
            dimension_semantics=dims,
            vmem_limit_bytes=vmem_limit,
        ),
    )(x_p, wt_pad, bias_pad)

    # Fast path: skip the slice when the output is already the exact shape.
    if (b_pad != b_sz) or (out_pad != out_features):
        return out_padded[:b_sz, :out_features]
    return out_padded


if __name__ == "__main__":
    key = jax.random.PRNGKey(0)

    def make_case(case_key, batch, in_f, out_f, x_dtype=jnp.float32):
        kx, kw, kb = jax.random.split(case_key, 3)
        # Mimic PyTorch nn.Linear default init: U[-1/sqrt(in), 1/sqrt(in)]
        bound = 1.0 / (in_f ** 0.5)
        w = jax.random.uniform(kw, (out_f, in_f), jnp.float32, -bound, bound)
        b = jax.random.uniform(kb, (out_f,), jnp.float32, -bound, bound)
        x = jax.random.normal(kx, (batch, in_f), jnp.float32).astype(x_dtype)
        return x, w, b

    k1, k2, k3 = jax.random.split(key, 3)

    # Case 1: tiny demo shapes — f32 weights, single-K 2-D grid, padded path.
    x1, w1, b1 = make_case(k1, 8, 32, 16)
    wt1, bb1 = prepare_linear_params(w1, b1, compute_dtype=jnp.float32)
    out1 = jax.block_until_ready(linear_forward(x1, wt1, bb1, out_features=16))
    ref1 = jnp.dot(x1, w1.T, precision=jax.lax.Precision.HIGHEST) + b1
    assert out1.shape == (8, 16)
    assert jnp.allclose(out1, ref1, atol=1e-4, rtol=1e-4)

    # Case 2: tile-aligned shapes — fast path (no pad copy / no output slice),
    # bf16 weights + in-kernel bf16 x cast, multi-K grid accumulating directly
    # into the f32 output block.
    x2, w2, b2 = make_case(k2, 256, 2048, 256)
    wt2, bb2 = prepare_linear_params(w2, b2)                 # bf16 weights
    out2 = jax.block_until_ready(linear_forward(x2, wt2, bb2, out_features=256))
    ref2 = jnp.dot(x2, w2.T, precision=jax.lax.Precision.HIGHEST) + b2
    assert out2.shape == (256, 256)
    assert jnp.allclose(out2, ref2, atol=2e-2, rtol=2e-2)    # bf16 operands, f32 acc

    # Case 3: bf16 activations/output — multi-K grid with f32 VMEM scratch.
    x3, w3, b3 = make_case(k3, 32, 2048, 128, x_dtype=jnp.bfloat16)
    wt3, bb3 = prepare_linear_params(w3, b3)
    out3 = jax.block_until_ready(linear_forward(x3, wt3, bb3, out_features=128))
    ref3 = (jnp.dot(x3.astype(jnp.float32), w3.T,
                    precision=jax.lax.Precision.HIGHEST) + b3)
    assert out3.shape == (32, 128)
    assert out3.dtype == jnp.bfloat16
    assert jnp.allclose(out3.astype(jnp.float32), ref3, atol=5e-2, rtol=5e-2)

    print("KERNEL_OK")
</pallas_src>

<mosaic_0001>
module attributes {stable_mosaic.version = 11 : i64} {
  func.func @_linear_kernel_single_k(%arg0: i32, %arg1: i32, %arg2: memref<8x128xf32, #tpu.memory_space<vmem>>, %arg3: memref<128x128xf32, #tpu.memory_space<vmem>>, %arg4: memref<1x128xf32, #tpu.memory_space<vmem>>, %arg5: memref<8x128xf32, #tpu.memory_space<vmem>>) attributes {dimension_semantics = [#tpu.dimension_semantics<parallel>, #tpu.dimension_semantics<parallel>], iteration_bounds = array<i64: 1, 1>, scalar_prefetch = 0 : i64, scratch_operands = 0 : i64, tpu.core_type = #tpu.core_type<tc>, window_params = [{transform_indices = @transform_0, window_bounds = array<i64: 8, 128>}, {transform_indices = @transform_1, window_bounds = array<i64: 128, 128>}, {transform_indices = @transform_2, window_bounds = array<i64: 1, 128>}, {transform_indices = @transform_3, window_bounds = array<i64: 8, 128>}]} {
    %c0 = arith.constant 0 : index
    %c0_0 = arith.constant 0 : index
    %0 = vector.load %arg2[%c0, %c0_0] : memref<8x128xf32, #tpu.memory_space<vmem>>, vector<8x128xf32>
    %c0_1 = arith.constant 0 : index
    %c0_2 = arith.constant 0 : index
    %1 = vector.load %arg3[%c0_1, %c0_2] : memref<128x128xf32, #tpu.memory_space<vmem>>, vector<128x128xf32>
    %cst = arith.constant dense<0.000000e+00> : vector<8x128xf32>
    %2 = tpu.matmul %0, %1, %cst {dimension_numbers = #tpu.dot_dimension_numbers<[1], [0], [0], [1], [0, 0, 1, 1], [], []>} : vector<8x128xf32>, vector<128x128xf32>, vector<8x128xf32> -> vector<8x128xf32>
    %c0_3 = arith.constant 0 : index
    %c0_4 = arith.constant 0 : index
    %3 = vector.load %arg4[%c0_3, %c0_4] : memref<1x128xf32, #tpu.memory_space<vmem>>, vector<1x128xf32>
    %4 = vector.broadcast %3 : vector<1x128xf32> to vector<8x128xf32>
    %5 = arith.addf %2, %4 : vector<8x128xf32>
    %c0_5 = arith.constant 0 : index
    %c0_6 = arith.constant 0 : index
    %6 = vector.load %arg5[%c0_5, %c0_6] : memref<8x128xf32, #tpu.memory_space<vmem>>, vector<8x128xf32>
    tpu.vector_store %arg5[%c0_5, %c0_6], %5 {strides = array<i32>} : memref<8x128xf32, #tpu.memory_space<vmem>>, vector<8x128xf32>,
    return
  }
  func.func @transform_0(%arg0: i32, %arg1: i32) -> (i32, i32) {
    %c0_i32 = arith.constant 0 : i32
    %c0_i32_0 = arith.constant 0 : i32
    return %arg0, %c0_i32 : i32, i32
  }
  func.func @transform_1(%arg0: i32, %arg1: i32) -> (i32, i32) {
    %c0_i32 = arith.constant 0 : i32
    %c0_i32_0 = arith.constant 0 : i32
    return %c0_i32, %arg1 : i32, i32
  }
  func.func @transform_2(%arg0: i32, %arg1: i32) -> (i32, i32) {
    %c0_i32 = arith.constant 0 : i32
    %c0_i32_0 = arith.constant 0 : i32
    return %c0_i32, %arg1 : i32, i32
  }
  func.func @transform_3(%arg0: i32, %arg1: i32) -> (i32, i32) {
    %c0_i32 = arith.constant 0 : i32
    return %arg0, %arg1 : i32, i32
  }
}

</mosaic_0001>

<llo_original>
// kernel: linear_forward.1
$region0: #{linear_forward.1}
  #allocation0 [shape = 'u32[]', space=smem, size = 0x4, offset = 0x4, fixed_abs, tag = 'smem constant byte address 0x4 - core index']
  #allocation1 [shape = 'u32[144,128]{1,0:T(1,128)}', space=vmem, size = 0x12000, scoped, tag = 'internal scratch']
  %s0 = inlined_call_operand.vmem [shape: f32[8,128], index: 0, kind: input, shape index: {}]
  %s1 = inlined_call_operand.hbm [shape: f32[128,128], index: 1, kind: input, shape index: {}]
  %s2 = inlined_call_operand.vmem [shape: f32[1,128], index: 2, kind: input, shape index: {}]
  %s3 = inlined_call_operand.hbm [shape: f32[8,128], index: 3, kind: output, shape index: {}]
  %s4 = sld [smem:[#allocation0]]
  $region26: #{linear_forward.1} parent=0
    _
  %s6 = ssub.s32 1, %s4
  %s7 = scalar_select 0, %s6, %s4
  $region1: #{linear_forward.1} parent=0
    #allocation2 [shape = 'u8[65536]{0}', space=vmem, size = 0x10000, scoped, tag = 'input window, operand 1, single buffered']
    #allocation3 [shape = 's32[1]{0}', space=sflag, size = 0x4, scoped, tag = 'scoped memory for linear_forward.1']
    #allocation4 [shape = 's32[1]{0}', space=sflag, size = 0x4, scoped, tag = 'scoped memory for linear_forward.1']
    #allocation5 [shape = 'u8[4096]{0}', space=vmem, size = 0x1000, scoped, tag = 'output window, operand 0, single buffered']
    %8 = vsyncpa [#allocation3], 0
    %9 = vsyncpa [#allocation4], 0
    // Predicated region
    $region2: #{linear_forward.1} parent=1 // pred_check
      _
    $region3: #{linear_forward.1} parent=1 // pred_check_branch
      %11 = sbr.rel (0) target = $region5
    $region4: #{linear_forward.1} parent=1 // pred_region
      _
    $region5: #{linear_forward.1} parent=1 // pred_fallthru
      _
    // Predicated region
    $region6: #{linear_forward.1} parent=1 // pred_check
      _
    $region7: #{linear_forward.1} parent=1 // pred_check_branch
      %13 = sbr.rel (0) target = $region9
    $region8: #{linear_forward.1} parent=1 // pred_region
      %s15 = ssub.s32 2048, 2048
      %16 = vsyncadd [#allocation3], %s15
      %s17 = sshll.u32 [#allocation2], 4
      %s18 = int_to_ptr.vmem [resolvable:$true] %s17
      %23 = dma.hbm_to_vmem [thread:$0]  %s1, 2048, %s18, [#allocation3], 128, 128, 8
    $region9: #{linear_forward.1} parent=1 // pred_fallthru
      _
    // Predicated region
    $region10: #{linear_forward.1} parent=1 // pred_check
      _
    $region11: #{linear_forward.1} parent=1 // pred_check_branch
      %25 = sbr.rel (0) target = $region13
    $region12: #{linear_forward.1} parent=1 // pred_region
      _
    $region13: #{linear_forward.1} parent=1 // pred_fallthru
      _
    // Predicated region
    $region14: #{linear_forward.1} parent=1 // pred_check
      _
    $region15: #{linear_forward.1} parent=1 // pred_check_branch
      %27 = sbr.rel (0) target = $region17
    $region16: #{linear_forward.1} parent=1 // pred_region
      %28 = dma.done [#allocation3], 2048
    $region17: #{linear_forward.1} parent=1 // pred_fallthru
      _
    %v29 = vld [vmem:[%s0] sm:$0xff]
    %v30 = vld [vmem:[#allocation2] sm:$0xff]
    %v31 = vld [vmem:[#allocation2 + $0x8] sm:$0xff]
    %v32 = vld [vmem:[#allocation2 + $0x10] sm:$0xff]
    %v33 = vld [vmem:[#allocation2 + $0x18] sm:$0xff]
    %v34 = vld [vmem:[#allocation2 + $0x20] sm:$0xff]
    %v35 = vld [vmem:[#allocation2 + $0x28] sm:$0xff]
    %v36 = vld [vmem:[#allocation2 + $0x30] sm:$0xff]
    %v37 = vld [vmem:[#allocation2 + $0x38] sm:$0xff]
    %v38 = vld [vmem:[#allocation2 + $0x40] sm:$0xff]
    %v39 = vld [vmem:[#allocation2 + $0x48] sm:$0xff]
    %v40 = vld [vmem:[#allocation2 + $0x50] sm:$0xff]
    %v41 = vld [vmem:[#allocation2 + $0x58] sm:$0xff]
    %v42 = vld [vmem:[#allocation2 + $0x60] sm:$0xff]
    %v43 = vld [vmem:[#allocation2 + $0x68] sm:$0xff]
    %v44 = vld [vmem:[#allocation2 + $0x70] sm:$0xff]
    %v45 = vld [vmem:[#allocation2 + $0x78] sm:$0xff]
    %v46 = vld [vmem:[%s2] sm:$0x1]
    %v48 = vlaneseq
    %v49 = vshrl.u32 %v48, 7
    %v50 = vsub.s32 0, %v49
    %v51 = vrot.slane %v46, %v50
    %53 = vmatprep.subr.mxu0 0.0
    %54 = vmatpush1.msra.mxu0 %v30
    %55 = vmatprep.subr.mxu0 0.0
    %56 = vmatpush1.msra.mxu0 %v31
    %57 = vmatprep.subr.mxu0 0.0
    %58 = vmatpush1.msra.mxu0 %v32
    %59 = vmatprep.subr.mxu0 0.0
    %60 = vmatpush1.msra.mxu0 %v33
    %61 = vmatprep.subr.mxu0 0.0
    %62 = vmatpush1.msra.mxu0 %v34
    %63 = vmatprep.subr.mxu0 0.0
    %64 = vmatpush1.msra.mxu0 %v35
    %65 = vmatprep.subr.mxu0 0.0
    %66 = vmatpush1.msra.mxu0 %v36
    %67 = vmatprep.subr.mxu0 0.0
    %68 = vmatpush1.msra.mxu0 %v37
    %69 = vmatprep.subr.mxu0 0.0
    %70 = vmatpush1.msra.mxu0 %v38
    %71 = vmatprep.subr.mxu0 0.0
    %72 = vmatpush1.msra.mxu0 %v39
    %73 = vmatprep.subr.mxu0 0.0
    %74 = vmatpush1.msra.mxu0 %v40
    %75 = vmatprep.subr.mxu0 0.0
    %76 = vmatpush1.msra.mxu0 %v41
    %77 = vmatprep.subr.mxu0 0.0
    %78 = vmatpush1.msra.mxu0 %v42
    %79 = vmatprep.subr.mxu0 0.0
    %80 = vmatpush1.msra.mxu0 %v43
    %81 = vmatprep.subr.mxu0 0.0
    %82 = vmatpush1.msra.mxu0 %v44
    %83 = vmatprep.subr.mxu0 0.0
    %84 = vmatpush1.msra.mxu0 %v45
    %85 = vmatprep.subr.mxu0 0.0
    %86 = vmatpush1.msra.mxu0 0.0
    %87 = vmatprep.subr.mxu0 0.0
    %88 = vmatpush1.msra.mxu0 0.0
    %89 = vmatprep.subr.mxu0 0.0
    %90 = vmatpush1.msra.mxu0 0.0
    %91 = vmatprep.subr.mxu0 0.0
    %92 = vmatpush1.msra.mxu0 0.0
    %93 = vmatprep.subr.mxu0 0.0
    %94 = vmatpush1.msra.mxu0 0.0
    %95 = vmatprep.subr.mxu0 0.0
    %96 = vmatpush1.msra.mxu0 0.0
    %97 = vmatprep.subr.mxu0 0.0
    %98 = vmatpush1.msra.mxu0 0.0
    %99 = vmatprep.subr.mxu0 0.0
    %100 = vmatpush1.msra.mxu0 0.0
    %101 = vmatprep.subr.mxu0 0.0
    %102 = vmatpush1.msra.mxu0 0.0
    %103 = vmatprep.subr.mxu0 0.0
    %104 = vmatpush1.msra.mxu0 0.0
    %105 = vmatprep.subr.mxu0 0.0
    %106 = vmatpush1.msra.mxu0 0.0
    %107 = vmatprep.subr.mxu0 0.0
    %108 = vmatpush1.msra.mxu0 0.0
    %109 = vmatprep.subr.mxu0 0.0
    %110 = vmatpush1.msra.mxu0 0.0
    %111 = vmatprep.subr.mxu0 0.0
    %112 = vmatpush1.msra.mxu0 0.0
    %113 = vmatprep.subr.mxu0 0.0
    %114 = vmatpush1.msra.mxu0 0.0
    %115 = vmatprep.subr.mxu0 0.0
    %116 = vmatpush1.msra.mxu0 0.0
    %117 = vmatprep.mubr.f32.mxu0 0.0
    %118 = vmatmul.mubr.f32.gmra.mrb[0].mxu0 %v29
    %v119 = vpop.f32.mrb[0].mxu0
    %v120 = vadd.f32 %v51, %v119
    %v121 = vpop.f32.mrb[0].mxu0
    %122 = vdwg.mxu0
    %123 = vst [vmem:[#allocation5] sm:$0xff] %v120
    // Predicated region
    $region18: #{linear_forward.1} parent=1 // pred_check
      _
    $region19: #{linear_forward.1} parent=1 // pred_check_branch
      %125 = sbr.rel (0) target = $region21
    $region20: #{linear_forward.1} parent=1 // pred_region
      %s127 = ssub.s32 128, 128
      %128 = vsyncadd [#allocation4], %s127
      %s130 = sshll.u32 [#allocation5], 4
      %s131 = int_to_ptr.vmem [resolvable:$true] %s130
      %133 = dma.vmem_to_hbm [thread:$0]  %s131, 128, %s3, [#allocation4]
    $region21: #{linear_forward.1} parent=1 // pred_fallthru
      _
    // Predicated region
    $region22: #{linear_forward.1} parent=1 // pred_check
      _
    $region23: #{linear_forward.1} parent=1 // pred_check_branch
      %135 = sbr.rel (0) target = $region25
    $region24: #{linear_forward.1} parent=1 // pred_region
      %136 = dma.done [#allocation4], 128
    $region25: #{linear_forward.1} parent=1 // pred_fallthru
      _
    %137 = vsyncpa [#allocation3], 1
    %138 = vsyncpa [#allocation4], 1

</llo_original>
